<compile_context>
chip_gen: v5e
topology: v5e:2x2
jax: 0.10.0
libtpu: 0.0.40
codegen_flags: <defaults>
</compile_context>

<pallas_src>
import functools

import jax
import jax.numpy as jnp
from jax.experimental import pallas as pl
from jax.experimental.pallas import tpu as pltpu


def _cdiv(a, b):
    return -(-a // b)


def xornet_kernel(x_ref, w1a_ref, w1c_ref, b1_ref, w2_ref, b2_ref, o_ref):
    """x_ref : (2, R, 128) VMEM f32 -- feature-major, batch dense on sublanes+lanes
    w1a_ref: (4,) SMEM -- 0.5 * W1[0, :]   (feature-0 -> hidden j)
    w1c_ref: (4,) SMEM -- 0.5 * W1[1, :]   (feature-1 -> hidden j)
    b1_ref : (4,) SMEM -- 0.5 * b1
    w2_ref : (4,) SMEM -- 0.5 * W2[:, 0]
    b2_ref : (1,) SMEM -- b2 + 0.5 * sum(W2)
    o_ref  : (R, 128) VMEM f32

    Computes  b2' + sum_j tanh(z_j/2) * (0.5*W2[j])  ==  sigmoid(z) @ W2 + b2.
    """
    x0 = x_ref[0]                        # (R, 128) dense
    x1 = x_ref[1]                        # (R, 128) dense
    acc = jnp.full_like(x0, b2_ref[0])   # start from folded bias (drops final add)
    for j in range(4):                   # unrolled over the 4 hidden units
        z = x0 * w1a_ref[j] + x1 * w1c_ref[j] + b1_ref[j]
        acc = acc + jnp.tanh(z) * w2_ref[j]   # tanh -> EUP slot; rest on the VPU
    o_ref[...] = acc.astype(o_ref.dtype)


def _pick_tile_rows(r_total):
    """Rows-of-128 batch elements per grid step, sized per TPU generation."""
    kind = ""
    try:
        kind = jax.devices()[0].device_kind.lower()
    except Exception:
        pass
    # Double-buffered working set ~= 3 KiB * tile_rows
    # (input block 2*R*128*4 B + output block R*128*4 B, x2 buffers).
    if ("v5" in kind) or ("v6" in kind):
        cap = 16384          # ~48 MiB working set (128 MiB physical VMEM)
    else:
        cap = 8192           # ~24 MiB working set -- safe on v7x's 64 MiB VMEM
    if r_total <= 8:
        # Single (possibly sub-8-row) block: block dim == full array dim is legal.
        return r_total
    # >= 2 grid steps so "parallel" can shard across TensorCores; multiple of 8
    # so the (possibly partial) last block satisfies the (8,128) rule.
    return min(cap, _cdiv(_cdiv(r_total, 2), 8) * 8)


@functools.partial(jax.jit, static_argnames=("tile_rows",))
def _xornet_pallas(x, w1, b1, w2, b2, *, tile_rows):
    B = x.shape[0]
    b_pad = _cdiv(B, 128) * 128
    r_total = b_pad // 128

    # Feature-major, sublane/lane-dense view of x: (2, R, 128).
    # One fused XLA transpose+pad pass; padding only to the 128-lane boundary.
    x_t = jnp.pad(x.astype(jnp.float32).T, ((0, 0), (0, b_pad - B)))
    x_t = x_t.reshape(2, r_total, 128)

    # Fold the sigmoid(z) = 0.5 + 0.5*tanh(z/2) scale factors into the params.
    w1f = w1.astype(jnp.float32)
    w2f = w2.astype(jnp.float32)
    w1a = 0.5 * w1f[0, :]                                      # (4,)
    w1c = 0.5 * w1f[1, :]                                      # (4,)
    b1h = 0.5 * b1.astype(jnp.float32)                         # (4,)
    w2h = 0.5 * w2f[:, 0]                                      # (4,)
    b2h = b2.astype(jnp.float32) + 0.5 * jnp.sum(w2f[:, 0])    # (1,)

    grid_r = _cdiv(r_total, tile_rows)

    # Raise scoped VMEM to cover the double-buffered working set (+ headroom).
    block_bytes = (2 * tile_rows * 128 + tile_rows * 128) * 4
    vmem_limit = int(max(16 * 1024 * 1024, 2 * block_bytes + 4 * 1024 * 1024))

    smem = pl.BlockSpec(memory_space=pltpu.MemorySpace.SMEM)

    out = pl.pallas_call(
        xornet_kernel,
        out_shape=jax.ShapeDtypeStruct((r_total, 128), jnp.float32),
        grid=(grid_r,),
        in_specs=[
            pl.BlockSpec((2, tile_rows, 128), lambda i: (0, i, 0)),  # activations
            smem, smem, smem, smem, smem,                            # folded params
        ],
        out_specs=pl.BlockSpec((tile_rows, 128), lambda i: (i, 0)),
        compiler_params=pltpu.CompilerParams(
            dimension_semantics=("parallel",),
            vmem_limit_bytes=vmem_limit,
        ),
    )(x_t, w1a, w1c, b1h, w2h, b2h)

    return out.reshape(-1)[:B].reshape(B, 1)


def xornet_forward(x, w1, b1, w2, b2):
    """x: (B, 2).  w1: (2, 4) (in, out), b1: (4,), w2: (4, 1), b2: (1,).

    Computes sigmoid(x @ w1 + b1) @ w2 + b2, matching PyTorch's
    Linear(2,4) -> sigmoid -> Linear(4,1) (torch weights transposed to (in,out)).
    """
    r_total = _cdiv(x.shape[0], 128)
    tile_rows = _pick_tile_rows(r_total)
    return _xornet_pallas(x, w1, b1, w2, b2, tile_rows=tile_rows)


def init_params(key):
    # Deterministic init mimicking nn.Linear's uniform(-1/sqrt(fan_in), +1/sqrt(fan_in))
    k1, k2, k3, k4 = jax.random.split(key, 4)
    bound1 = 1.0 / jnp.sqrt(2.0)
    bound2 = 1.0 / jnp.sqrt(4.0)
    w1 = jax.random.uniform(k1, (2, 4), jnp.float32, -bound1, bound1)   # (in, out)
    b1 = jax.random.uniform(k2, (4,), jnp.float32, -bound1, bound1)
    w2 = jax.random.uniform(k3, (4, 1), jnp.float32, -bound2, bound2)   # (in, out)
    b2 = jax.random.uniform(k4, (1,), jnp.float32, -bound2, bound2)
    return w1, b1, w2, b2


def reference_forward(x, w1, b1, w2, b2):
    h = jax.nn.sigmoid(x @ w1 + b1)
    return h @ w2 + b2


if __name__ == "__main__":
    key = jax.random.PRNGKey(0)
    kx, kp, kx2 = jax.random.split(key, 3)

    # Small batch of 2-feature inputs, consistent with Linear(2, 4).
    B = 8
    x = jax.random.uniform(kx, (B, 2), jnp.float32)
    w1, b1, w2, b2 = init_params(kp)

    out = jax.block_until_ready(xornet_forward(x, w1, b1, w2, b2))
    ref = reference_forward(x, w1, b1, w2, b2)
    assert out.shape == (B, 1)
    assert jnp.allclose(out, ref, atol=1e-5, rtol=1e-5)

    # Also exercise the multi-step grid + masked partial boundary block path.
    B2 = 1200
    x2 = jax.random.uniform(kx2, (B2, 2), jnp.float32)
    out2 = jax.block_until_ready(xornet_forward(x2, w1, b1, w2, b2))
    ref2 = reference_forward(x2, w1, b1, w2, b2)
    assert out2.shape == (B2, 1)
    assert jnp.allclose(out2, ref2, atol=1e-5, rtol=1e-5)

    print("KERNEL_OK")
</pallas_src>

<mosaic_0001>
module attributes {stable_mosaic.version = 11 : i64} {
  func.func @xornet_kernel(%arg0: i32, %arg1: memref<2x1x128xf32, #tpu.memory_space<vmem>>, %arg2: memref<4xf32, #tpu.memory_space<smem>>, %arg3: memref<4xf32, #tpu.memory_space<smem>>, %arg4: memref<4xf32, #tpu.memory_space<smem>>, %arg5: memref<4xf32, #tpu.memory_space<smem>>, %arg6: memref<1xf32, #tpu.memory_space<smem>>, %arg7: memref<1x128xf32, #tpu.memory_space<vmem>>) attributes {dimension_semantics = [#tpu.dimension_semantics<parallel>], iteration_bounds = array<i64: 1>, scalar_prefetch = 0 : i64, scratch_operands = 0 : i64, tpu.core_type = #tpu.core_type<tc>, window_params = [{transform_indices = @transform_0, window_bounds = array<i64: 2, 1, 128>}, {transform_indices = @transform_1, window_bounds = array<i64: 4>}, {transform_indices = @transform_2, window_bounds = array<i64: 4>}, {transform_indices = @transform_3, window_bounds = array<i64: 4>}, {transform_indices = @transform_4, window_bounds = array<i64: 4>}, {transform_indices = @transform_5, window_bounds = array<i64: 1>}, {transform_indices = @transform_6, window_bounds = array<i64: 1, 128>}]} {
    %c0 = arith.constant 0 : index
    %c0_0 = arith.constant 0 : index
    %c0_1 = arith.constant 0 : index
    %0 = vector.load %arg1[%c0, %c0_0, %c0_1] : memref<2x1x128xf32, #tpu.memory_space<vmem>>, vector<1x1x128xf32>
    %1 = vector.shape_cast %0 : vector<1x1x128xf32> to vector<1x128xf32>
    %c1 = arith.constant 1 : index
    %c0_2 = arith.constant 0 : index
    %c0_3 = arith.constant 0 : index
    %2 = vector.load %arg1[%c1, %c0_2, %c0_3] : memref<2x1x128xf32, #tpu.memory_space<vmem>>, vector<1x1x128xf32>
    %3 = vector.shape_cast %2 : vector<1x1x128xf32> to vector<1x128xf32>
    %c0_4 = arith.constant 0 : index
    %4 = memref.load %arg6[%c0_4] : memref<1xf32, #tpu.memory_space<smem>>
    %5 = vector.broadcast %4 : f32 to vector<1x128xf32>
    %c0_5 = arith.constant 0 : index
    %6 = memref.load %arg2[%c0_5] : memref<4xf32, #tpu.memory_space<smem>>
    %7 = vector.broadcast %6 : f32 to vector<1x128xf32>
    %8 = arith.mulf %1, %7 : vector<1x128xf32>
    %c0_6 = arith.constant 0 : index
    %9 = memref.load %arg3[%c0_6] : memref<4xf32, #tpu.memory_space<smem>>
    %10 = vector.broadcast %9 : f32 to vector<1x128xf32>
    %11 = arith.mulf %3, %10 : vector<1x128xf32>
    %12 = arith.addf %8, %11 : vector<1x128xf32>
    %c0_7 = arith.constant 0 : index
    %13 = memref.load %arg4[%c0_7] : memref<4xf32, #tpu.memory_space<smem>>
    %14 = vector.broadcast %13 : f32 to vector<1x128xf32>
    %15 = arith.addf %12, %14 : vector<1x128xf32>
    %16 = math.tanh %15 : vector<1x128xf32>
    %c0_8 = arith.constant 0 : index
    %17 = memref.load %arg5[%c0_8] : memref<4xf32, #tpu.memory_space<smem>>
    %18 = vector.broadcast %17 : f32 to vector<1x128xf32>
    %19 = arith.mulf %16, %18 : vector<1x128xf32>
    %20 = arith.addf %5, %19 : vector<1x128xf32>
    %c1_9 = arith.constant 1 : index
    %21 = memref.load %arg2[%c1_9] : memref<4xf32, #tpu.memory_space<smem>>
    %22 = vector.broadcast %21 : f32 to vector<1x128xf32>
    %23 = arith.mulf %1, %22 : vector<1x128xf32>
    %c1_10 = arith.constant 1 : index
    %24 = memref.load %arg3[%c1_10] : memref<4xf32, #tpu.memory_space<smem>>
    %25 = vector.broadcast %24 : f32 to vector<1x128xf32>
    %26 = arith.mulf %3, %25 : vector<1x128xf32>
    %27 = arith.addf %23, %26 : vector<1x128xf32>
    %c1_11 = arith.constant 1 : index
    %28 = memref.load %arg4[%c1_11] : memref<4xf32, #tpu.memory_space<smem>>
    %29 = vector.broadcast %28 : f32 to vector<1x128xf32>
    %30 = arith.addf %27, %29 : vector<1x128xf32>
    %31 = math.tanh %30 : vector<1x128xf32>
    %c1_12 = arith.constant 1 : index
    %32 = memref.load %arg5[%c1_12] : memref<4xf32, #tpu.memory_space<smem>>
    %33 = vector.broadcast %32 : f32 to vector<1x128xf32>
    %34 = arith.mulf %31, %33 : vector<1x128xf32>
    %35 = arith.addf %20, %34 : vector<1x128xf32>
    %c2 = arith.constant 2 : index
    %36 = memref.load %arg2[%c2] : memref<4xf32, #tpu.memory_space<smem>>
    %37 = vector.broadcast %36 : f32 to vector<1x128xf32>
    %38 = arith.mulf %1, %37 : vector<1x128xf32>
    %c2_13 = arith.constant 2 : index
    %39 = memref.load %arg3[%c2_13] : memref<4xf32, #tpu.memory_space<smem>>
    %40 = vector.broadcast %39 : f32 to vector<1x128xf32>
    %41 = arith.mulf %3, %40 : vector<1x128xf32>
    %42 = arith.addf %38, %41 : vector<1x128xf32>
    %c2_14 = arith.constant 2 : index
    %43 = memref.load %arg4[%c2_14] : memref<4xf32, #tpu.memory_space<smem>>
    %44 = vector.broadcast %43 : f32 to vector<1x128xf32>
    %45 = arith.addf %42, %44 : vector<1x128xf32>
    %46 = math.tanh %45 : vector<1x128xf32>
    %c2_15 = arith.constant 2 : index
    %47 = memref.load %arg5[%c2_15] : memref<4xf32, #tpu.memory_space<smem>>
    %48 = vector.broadcast %47 : f32 to vector<1x128xf32>
    %49 = arith.mulf %46, %48 : vector<1x128xf32>
    %50 = arith.addf %35, %49 : vector<1x128xf32>
    %c3 = arith.constant 3 : index
    %51 = memref.load %arg2[%c3] : memref<4xf32, #tpu.memory_space<smem>>
    %52 = vector.broadcast %51 : f32 to vector<1x128xf32>
    %53 = arith.mulf %1, %52 : vector<1x128xf32>
    %c3_16 = arith.constant 3 : index
    %54 = memref.load %arg3[%c3_16] : memref<4xf32, #tpu.memory_space<smem>>
    %55 = vector.broadcast %54 : f32 to vector<1x128xf32>
    %56 = arith.mulf %3, %55 : vector<1x128xf32>
    %57 = arith.addf %53, %56 : vector<1x128xf32>
    %c3_17 = arith.constant 3 : index
    %58 = memref.load %arg4[%c3_17] : memref<4xf32, #tpu.memory_space<smem>>
    %59 = vector.broadcast %58 : f32 to vector<1x128xf32>
    %60 = arith.addf %57, %59 : vector<1x128xf32>
    %61 = math.tanh %60 : vector<1x128xf32>
    %c3_18 = arith.constant 3 : index
    %62 = memref.load %arg5[%c3_18] : memref<4xf32, #tpu.memory_space<smem>>
    %63 = vector.broadcast %62 : f32 to vector<1x128xf32>
    %64 = arith.mulf %61, %63 : vector<1x128xf32>
    %65 = arith.addf %50, %64 : vector<1x128xf32>
    %c0_19 = arith.constant 0 : index
    %c0_20 = arith.constant 0 : index
    %66 = vector.load %arg7[%c0_19, %c0_20] : memref<1x128xf32, #tpu.memory_space<vmem>>, vector<1x128xf32>
    tpu.vector_store %arg7[%c0_19, %c0_20], %65 {strides = array<i32>} : memref<1x128xf32, #tpu.memory_space<vmem>>, vector<1x128xf32>,
    return
  }
  func.func @transform_0(%arg0: i32) -> (i32, i32, i32) {
    %c0_i32 = arith.constant 0 : i32
    %c0_i32_0 = arith.constant 0 : i32
    %c0_i32_1 = arith.constant 0 : i32
    return %c0_i32, %arg0, %c0_i32_0 : i32, i32, i32
  }
  func.func @transform_1(%arg0: i32) -> i32 {
    %c0_i32 = arith.constant 0 : i32
    %c0_i32_0 = arith.constant 0 : i32
    return %c0_i32 : i32
  }
  func.func @transform_2(%arg0: i32) -> i32 {
    %c0_i32 = arith.constant 0 : i32
    %c0_i32_0 = arith.constant 0 : i32
    return %c0_i32 : i32
  }
  func.func @transform_3(%arg0: i32) -> i32 {
    %c0_i32 = arith.constant 0 : i32
    %c0_i32_0 = arith.constant 0 : i32
    return %c0_i32 : i32
  }
  func.func @transform_4(%arg0: i32) -> i32 {
    %c0_i32 = arith.constant 0 : i32
    %c0_i32_0 = arith.constant 0 : i32
    return %c0_i32 : i32
  }
  func.func @transform_5(%arg0: i32) -> i32 {
    %c0_i32 = arith.constant 0 : i32
    %c0_i32_0 = arith.constant 0 : i32
    return %c0_i32 : i32
  }
  func.func @transform_6(%arg0: i32) -> (i32, i32) {
    %c0_i32 = arith.constant 0 : i32
    %c0_i32_0 = arith.constant 0 : i32
    return %arg0, %c0_i32 : i32, i32
  }
}

</mosaic_0001>

<llo_original>
// kernel: _xornet_pallas.1
$region0: #{_xornet_pallas.1}
  #allocation0 [shape = 'u32[]', space=smem, size = 0x4, offset = 0x4, fixed_abs, tag = 'smem constant byte address 0x4 - core index']
  #allocation1 [shape = 'u32[72,128]{1,0:T(1,128)}', space=vmem, size = 0x9000, scoped, tag = 'internal scratch']
  #allocation2 [shape = 'f32[1]{0:T(128)S(6)}', space=smem, size = 0x200, scoped, tag = 'scoped memory for _xornet_pallas.1']
  %s0 = inlined_call_operand.vmem [shape: f32[2,1,128], index: 0, kind: input, shape index: {}]
  %s1 = inlined_call_operand.vmem [shape: f32[4], index: 1, kind: input, shape index: {}]
  %s2 = inlined_call_operand.vmem [shape: f32[4], index: 2, kind: input, shape index: {}]
  %s3 = inlined_call_operand.vmem [shape: f32[4], index: 3, kind: input, shape index: {}]
  %s4 = inlined_call_operand.vmem [shape: f32[4], index: 4, kind: input, shape index: {}]
  %s5 = inlined_call_operand.<no memory space> [shape: f32[1], index: 5, kind: input, shape index: {}]
  %s6 = inlined_call_operand.vmem [shape: f32[1,128], index: 6, kind: output, shape index: {}]
  %s7 = sld [smem:[#allocation0]]
  $region50: #{_xornet_pallas.1} parent=0
    _
  %s9 = ssub.s32 1, %s7
  %s10 = scalar_select 0, %s9, %s7
  %11 = sst [smem:[#allocation2]] %s5
  $region1: #{_xornet_pallas.1} parent=0
    #allocation3 [shape = 'u8[512]{0}', space=smem, size = 0x200, scoped, tag = 'input window, operand 1, single buffered']
    #allocation4 [shape = 's32[1]{0}', space=sflag, size = 0x4, scoped, tag = 'scoped memory for _xornet_pallas.1']
    #allocation5 [shape = 'u8[512]{0}', space=smem, size = 0x200, scoped, tag = 'input window, operand 2, single buffered']
    #allocation6 [shape = 's32[1]{0}', space=sflag, size = 0x4, scoped, tag = 'scoped memory for _xornet_pallas.1']
    #allocation7 [shape = 'u8[512]{0}', space=smem, size = 0x200, scoped, tag = 'input window, operand 3, single buffered']
    #allocation8 [shape = 'u8[512]{0}', space=smem, size = 0x200, scoped, tag = 'input window, operand 4, single buffered']
    #allocation9 [shape = 's32[1]{0}', space=sflag, size = 0x4, scoped, tag = 'scoped memory for _xornet_pallas.1']
    %12 = vsyncpa [#allocation4], 0
    %13 = vsyncpa [#allocation6], 0
    %14 = vsyncpa [#allocation9], 0
    // Predicated region
    $region2: #{_xornet_pallas.1} parent=1 // pred_check
      _
    $region3: #{_xornet_pallas.1} parent=1 // pred_check_branch
      %16 = sbr.rel (0) target = $region5
    $region4: #{_xornet_pallas.1} parent=1 // pred_region
      _
    $region5: #{_xornet_pallas.1} parent=1 // pred_fallthru
      _
    // Predicated region
    $region6: #{_xornet_pallas.1} parent=1 // pred_check
      _
    $region7: #{_xornet_pallas.1} parent=1 // pred_check_branch
      %18 = sbr.rel (0) target = $region9
    $region8: #{_xornet_pallas.1} parent=1 // pred_region
      %20 = vsyncadd [#allocation4], 0
      %s22 = sshll.u32 %s1, 4
      %s23 = int_to_ptr.vmem [resolvable:$true] %s22
      %25 = dma.vmem_to_smem %s23, 16, [#allocation3], [#allocation4]
    $region9: #{_xornet_pallas.1} parent=1 // pred_fallthru
      _
    // Predicated region
    $region10: #{_xornet_pallas.1} parent=1 // pred_check
      _
    $region11: #{_xornet_pallas.1} parent=1 // pred_check_branch
      %27 = sbr.rel (0) target = $region13
    $region12: #{_xornet_pallas.1} parent=1 // pred_region
      %29 = vsyncadd [#allocation6], 0
      %s31 = sshll.u32 %s2, 4
      %s32 = int_to_ptr.vmem [resolvable:$true] %s31
      %34 = dma.vmem_to_smem %s32, 16, [#allocation5], [#allocation6]
    $region13: #{_xornet_pallas.1} parent=1 // pred_fallthru
      _
    // Predicated region
    $region14: #{_xornet_pallas.1} parent=1 // pred_check
      _
    $region15: #{_xornet_pallas.1} parent=1 // pred_check_branch
      %36 = sbr.rel (0) target = $region17
    $region16: #{_xornet_pallas.1} parent=1 // pred_region
      %38 = vsyncadd [#allocation6], 0
      %s40 = sshll.u32 %s3, 4
      %s41 = int_to_ptr.vmem [resolvable:$true] %s40
      %43 = dma.vmem_to_smem %s41, 16, [#allocation7], [#allocation6]
    $region17: #{_xornet_pallas.1} parent=1 // pred_fallthru
      _
    // Predicated region
    $region18: #{_xornet_pallas.1} parent=1 // pred_check
      _
    $region19: #{_xornet_pallas.1} parent=1 // pred_check_branch
      %45 = sbr.rel (0) target = $region21
    $region20: #{_xornet_pallas.1} parent=1 // pred_region
      %47 = vsyncadd [#allocation9], 0
      %s49 = sshll.u32 %s4, 4
      %s50 = int_to_ptr.vmem [resolvable:$true] %s49
      %52 = dma.vmem_to_smem %s50, 16, [#allocation8], [#allocation9]
    $region21: #{_xornet_pallas.1} parent=1 // pred_fallthru
      _
    // Predicated region
    $region22: #{_xornet_pallas.1} parent=1 // pred_check
      _
    $region23: #{_xornet_pallas.1} parent=1 // pred_check_branch
      %54 = sbr.rel (0) target = $region25
    $region24: #{_xornet_pallas.1} parent=1 // pred_region
      _
    $region25: #{_xornet_pallas.1} parent=1 // pred_fallthru
      _
    // Predicated region
    $region26: #{_xornet_pallas.1} parent=1 // pred_check
      _
    $region27: #{_xornet_pallas.1} parent=1 // pred_check_branch
      %56 = sbr.rel (0) target = $region29
    $region28: #{_xornet_pallas.1} parent=1 // pred_region
      %58 = dma.done [#allocation4], 16
    $region29: #{_xornet_pallas.1} parent=1 // pred_fallthru
      _
    // Predicated region
    $region30: #{_xornet_pallas.1} parent=1 // pred_check
      _
    $region31: #{_xornet_pallas.1} parent=1 // pred_check_branch
      %60 = sbr.rel (0) target = $region33
    $region32: #{_xornet_pallas.1} parent=1 // pred_region
      %62 = dma.done [#allocation6], 16
    $region33: #{_xornet_pallas.1} parent=1 // pred_fallthru
      _
    // Predicated region
    $region34: #{_xornet_pallas.1} parent=1 // pred_check
      _
    $region35: #{_xornet_pallas.1} parent=1 // pred_check_branch
      %64 = sbr.rel (0) target = $region37
    $region36: #{_xornet_pallas.1} parent=1 // pred_region
      %66 = dma.done [#allocation6], 16
    $region37: #{_xornet_pallas.1} parent=1 // pred_fallthru
      _
    // Predicated region
    $region38: #{_xornet_pallas.1} parent=1 // pred_check
      _
    $region39: #{_xornet_pallas.1} parent=1 // pred_check_branch
      %68 = sbr.rel (0) target = $region41
    $region40: #{_xornet_pallas.1} parent=1 // pred_region
      %70 = dma.done [#allocation9], 16
    $region41: #{_xornet_pallas.1} parent=1 // pred_fallthru
      _
    %71 = sfence
    %v72 = vld [vmem:[%s0] sm:$0x1]
    %s73 = scalar_lea.vmem %s0, 1
    %v74 = vld [vmem:[%s73] sm:$0x1]
    %s75 = sld [smem:[#allocation2]]
    %v76 = vstv %s75
    %s77 = sld [smem:[#allocation3]]
    %v78 = vstv %s77
    %v79 = vmul.f32 %v72, %v78
    %s80 = sld [smem:[#allocation5]]
    %v81 = vstv %s80
    %v82 = vmul.f32 %v74, %v81
    %v83 = vadd.f32 %v79, %v82
    %s84 = sld [smem:[#allocation7]]
    %v85 = vstv %s84
    %v86 = vadd.f32 %v83, %v85
    %v87 = vtanh.pop %v86
    %s88 = sld [smem:[#allocation8]]
    %v89 = vstv %s88
    %v90 = vmul.f32 %v87, %v89
    %v91 = vadd.f32 %v76, %v90
    %s92 = sld [smem:[#allocation3 + $0x1]]
    %v93 = vstv %s92
    %v94 = vmul.f32 %v72, %v93
    %s95 = sld [smem:[#allocation5 + $0x1]]
    %v96 = vstv %s95
    %v97 = vmul.f32 %v74, %v96
    %v98 = vadd.f32 %v94, %v97
    %s99 = sld [smem:[#allocation7 + $0x1]]
    %v100 = vstv %s99
    %v101 = vadd.f32 %v98, %v100
    %v102 = vtanh.pop %v101
    %s103 = sld [smem:[#allocation8 + $0x1]]
    %v104 = vstv %s103
    %v105 = vmul.f32 %v102, %v104
    %v106 = vadd.f32 %v91, %v105
    %s107 = sld [smem:[#allocation3 + $0x2]]
    %v108 = vstv %s107
    %v109 = vmul.f32 %v72, %v108
    %s110 = sld [smem:[#allocation5 + $0x2]]
    %v111 = vstv %s110
    %v112 = vmul.f32 %v74, %v111
    %v113 = vadd.f32 %v109, %v112
    %s114 = sld [smem:[#allocation7 + $0x2]]
    %v115 = vstv %s114
    %v116 = vadd.f32 %v113, %v115
    %v117 = vtanh.pop %v116
    %s118 = sld [smem:[#allocation8 + $0x2]]
    %v119 = vstv %s118
    %v120 = vmul.f32 %v117, %v119
    %v121 = vadd.f32 %v106, %v120
    %s122 = sld [smem:[#allocation3 + $0x3]]
    %v123 = vstv %s122
    %v124 = vmul.f32 %v72, %v123
    %s125 = sld [smem:[#allocation5 + $0x3]]
    %v126 = vstv %s125
    %v127 = vmul.f32 %v74, %v126
    %v128 = vadd.f32 %v124, %v127
    %s129 = sld [smem:[#allocation7 + $0x3]]
    %v130 = vstv %s129
    %v131 = vadd.f32 %v128, %v130
    %v132 = vtanh.pop %v131
    %s133 = sld [smem:[#allocation8 + $0x3]]
    %v134 = vstv %s133
    %v135 = vmul.f32 %v132, %v134
    %v136 = vadd.f32 %v121, %v135
    %137 = vst [vmem:[%s6] sm:$0x1] %v136
    // Predicated region
    $region42: #{_xornet_pallas.1} parent=1 // pred_check
      _
    $region43: #{_xornet_pallas.1} parent=1 // pred_check_branch
      %139 = sbr.rel (0) target = $region45
    $region44: #{_xornet_pallas.1} parent=1 // pred_region
      _
    $region45: #{_xornet_pallas.1} parent=1 // pred_fallthru
      _
    // Predicated region
    $region46: #{_xornet_pallas.1} parent=1 // pred_check
      _
    $region47: #{_xornet_pallas.1} parent=1 // pred_check_branch
      %141 = sbr.rel (0) target = $region49
    $region48: #{_xornet_pallas.1} parent=1 // pred_region
      _
    $region49: #{_xornet_pallas.1} parent=1 // pred_fallthru
      _
    %142 = vsyncpa [#allocation4], 1
    %143 = vsyncpa [#allocation6], 1
    %144 = vsyncpa [#allocation9], 1

</llo_original>
